<compile_context>
chip_gen: v5e
topology: v5e:2x2
jax: 0.10.0
libtpu: 0.0.40
codegen_flags: <defaults>
</compile_context>

<pallas_src>
import functools

import jax
import jax.numpy as jnp
from jax.experimental import pallas as pl
from jax.experimental.pallas import tpu as pltpu


# --------------------------------------------------------------------------- #
# Fused kernel: grid = (phase, node_tile)
#   phase 0 : score accumulation + beta finalize (into VMEM scratch)
#   phase 1 : beta-weighted sum over relations
# --------------------------------------------------------------------------- #
def _relation_agg_kernel(h_ref, w1g_ref, b1g_ref, sg_ref, e_ref, out_ref,
                         acc_ref, beta_ref, *, inv_n, d_dim, r_dim):
    phase = pl.program_id(0)
    tile = pl.program_id(1)
    n_tiles = pl.num_programs(1)

    @pl.when(phase == 0)
    def _scores():
        @pl.when(tile == 0)
        def _init():
            acc_ref[...] = jnp.zeros_like(acc_ref)

        # (tile_rows, R*D) @ kron(I_R, W1) (R*D, R*H): 128-wide contraction,
        # bf16 (or f32) operands, f32 accumulation on the MXU.
        z = jnp.dot(h_ref[...].astype(w1g_ref.dtype), w1g_ref[...],
                    preferred_element_type=jnp.float32)
        t = jnp.tanh(z + b1g_ref[...])                      # EUP
        acc_ref[...] += jnp.sum(t, axis=0, keepdims=True)   # (1, R*H), XLU reduce

        @pl.when(tile == n_tiles - 1)
        def _finalize():
            # Per-relation mean score: fold the (H -> 1) projection and the
            # relation grouping into one tiny once-per-call matmul.
            w_rel = jnp.dot(acc_ref[...], sg_ref[...],
                            preferred_element_type=jnp.float32) * inv_n    # (1, R)
            m = jnp.max(w_rel, axis=-1, keepdims=True)
            ex = jnp.exp(w_rel - m)
            beta = ex / jnp.sum(ex, axis=-1, keepdims=True)                # (1, R)
            # Expand beta across lanes (beta_lanes[l] = beta[l // D]) with a
            # precomputed one-hot basis E -> tiny (1,R)@(R,R*D) dot; this keeps
            # the phase-0 epilogue off the critical tail (no big B construction).
            beta_ref[...] = jnp.dot(beta, e_ref[...],
                                    preferred_element_type=jnp.float32)    # (1, R*D)

    @pl.when(phase == 1)
    def _aggregate():
        # out[n, d] = sum_r beta_r * h[n, r, d]; full-width VPU multiply then
        # R-1 adds of D-lane slices — no MXU, no dense kron matrix.
        weighted = h_ref[...] * beta_ref[...]                # (tile_rows, R*D) f32
        acc = weighted[:, 0:d_dim]
        for r in range(1, r_dim):                            # r_dim is small & static
            acc = acc + weighted[:, r * d_dim:(r + 1) * d_dim]
        out_ref[...] = acc.astype(out_ref.dtype)


# --------------------------------------------------------------------------- #
# Host-side, once-per-parameter-set weight plumbing (hoisted out of the hot path)
# --------------------------------------------------------------------------- #
def prepare_relation_agg_params(w1, b1, w2, n_rel, *, matmul_dtype=jnp.bfloat16):
    """w1: (D, H); b1: (1, H); w2: (H, 1). Returns expanded weights for the kernel."""
    w1 = jnp.asarray(w1, jnp.float32)
    b1 = jnp.asarray(b1, jnp.float32).reshape(1, -1)
    w2 = jnp.asarray(w2, jnp.float32)
    D, H = w1.shape
    eye_r = jnp.eye(n_rel, dtype=jnp.float32)
    return dict(
        w1g=jnp.kron(eye_r, w1).astype(matmul_dtype),   # (R*D, R*H) block-diag proj
        b1g=jnp.tile(b1, (1, n_rel)),                   # (1, R*H)
        sg=jnp.kron(eye_r, w2),                         # (R*H, R) per-relation w2
        e=jnp.repeat(eye_r, D, axis=1),                 # (R, R*D) beta -> lane broadcast
        n_rel=n_rel, d=D, h=H,
    )


# --------------------------------------------------------------------------- #
# Wrapper
# --------------------------------------------------------------------------- #
def relation_agg(h, params, *, tile_rows_target=1024,
                 vmem_limit_bytes=32 * 1024 * 1024):
    """h: (N, R, D) -> (N, D) float32, matching RelationAgg.forward."""
    N, R, D = h.shape
    H = params["h"]
    assert R == params["n_rel"] and D == params["d"]
    RD, RH = R * D, R * H

    # One node per row -> (N, R*D); for D=32, R=4 this is a 128-lane-dense view
    # (free HBM reshape).  h stays f32 so the phase-1 weighted sum is exact.
    # TODO(synk): optionally store h as bf16 in HBM to halve traffic on v6e/v7x.
    h4 = h.astype(jnp.float32).reshape(N, RD)

    # Tile the node axis in multiples of 8, tiles <= tile_rows_target, minimal pad.
    rows8 = -(-N // 8) * 8
    num_tiles = -(-rows8 // tile_rows_target)
    tile_rows = -(-rows8 // (num_tiles * 8)) * 8
    n_pad = tile_rows * num_tiles
    if n_pad != N:
        # Zero-padded rows add the same tanh(b1)@w2 constant to every relation
        # (softmax-invariant); inv_n below still divides by the true N.
        h4 = jnp.pad(h4, ((0, n_pad - N), (0, 0)))

    kernel = functools.partial(_relation_agg_kernel,
                               inv_n=1.0 / N, d_dim=D, r_dim=R)

    out = pl.pallas_call(
        kernel,
        out_shape=jax.ShapeDtypeStruct((n_pad, D), jnp.float32),
        grid_spec=pltpu.PrefetchScalarGridSpec(
            num_scalar_prefetch=0,
            grid=(2, num_tiles),                               # (phase, node tile)
            in_specs=[
                pl.BlockSpec((tile_rows, RD), lambda p, i: (i, 0)),   # h tile
                pl.BlockSpec((RD, RH), lambda p, i: (0, 0)),          # kron(I_R, W1)
                pl.BlockSpec((1, RH), lambda p, i: (0, 0)),           # tiled b1
                pl.BlockSpec((RH, R), lambda p, i: (0, 0)),           # kron(I_R, w2)
                pl.BlockSpec((R, RD), lambda p, i: (0, 0)),           # one-hot basis E
            ],
            # i*p keeps the output on block 0 during phase 0 (never written back),
            # then sweeps blocks 0..num_tiles-1 during phase 1: each output block
            # is written to HBM exactly once and only with valid data.
            out_specs=pl.BlockSpec((tile_rows, D), lambda p, i: (i * p, 0)),
            scratch_shapes=[pltpu.VMEM((1, RH), jnp.float32),   # score accumulator
                            pltpu.VMEM((1, RD), jnp.float32)],  # beta (lane-broadcast)
        ),
        compiler_params=pltpu.CompilerParams(
            # Both axes are sequential: phase 0 must finish (and finalize beta)
            # before phase 1, and the node axis of phase 0 is a reduction.
            dimension_semantics=("arbitrary", "arbitrary"),
            vmem_limit_bytes=vmem_limit_bytes),
    )(h4, params["w1g"], params["b1g"], params["sg"], params["e"])

    return out[:N]


# --------------------------------------------------------------------------- #
# Pure-JAX reference mirroring the PyTorch forward
# --------------------------------------------------------------------------- #
def relation_agg_ref(h, w1, b1, w2):
    z = jnp.tanh(jnp.einsum("nrd,dh->nrh", h, w1) + b1[0])
    s = jnp.einsum("nrh,hk->nrk", z, w2)          # (N, R, 1)
    w = s.mean(axis=0)                            # (R, 1)
    beta = jax.nn.softmax(w, axis=0)              # (R, 1)
    return (beta[None, :, :] * h).sum(axis=1)     # (N, D)


if __name__ == "__main__":
    # Small shapes consistent with the module: N nodes, R relations, n_inp, n_hid.
    N, R, n_inp, n_hid = 8, 4, 32, 32

    key = jax.random.PRNGKey(0)
    k_h, k_w1, k_b1, k_w2, k_h2 = jax.random.split(key, 5)

    h = jax.random.normal(k_h, (N, R, n_inp), dtype=jnp.float32)
    w1 = jax.random.normal(k_w1, (n_inp, n_hid), dtype=jnp.float32) / jnp.sqrt(n_inp)
    b1 = jax.random.normal(k_b1, (1, n_hid), dtype=jnp.float32) * 0.01
    w2 = jax.random.normal(k_w2, (n_hid, 1), dtype=jnp.float32) / jnp.sqrt(n_hid)

    # Exact path (f32 matmul operands): strict check, single-tile resident grid.
    params_f32 = prepare_relation_agg_params(w1, b1, w2, R, matmul_dtype=jnp.float32)
    out = jax.block_until_ready(relation_agg(h, params_f32))
    ref = relation_agg_ref(h, w1, b1, w2)
    assert out.shape == (N, n_inp), out.shape
    assert jnp.allclose(out, ref, atol=1e-4, rtol=1e-4), \
        float(jnp.max(jnp.abs(out - ref)))

    # Default fast path (bf16 MXU operands in the score matmul, f32 accumulation):
    # exercises the multi-tile accumulation (N=2500 -> 3 tiles of 840 rows),
    # node padding, and the phase-0 -> phase-1 handoff through VMEM scratch.
    params = prepare_relation_agg_params(w1, b1, w2, R)          # bf16 by default
    N_big = 2500
    h_big = jax.random.normal(k_h2, (N_big, R, n_inp), dtype=jnp.float32)
    out_big = jax.block_until_ready(relation_agg(h_big, params))
    ref_big = relation_agg_ref(h_big, w1, b1, w2)
    assert out_big.shape == (N_big, n_inp), out_big.shape
    assert jnp.allclose(out_big, ref_big, atol=2e-2, rtol=2e-2), \
        float(jnp.max(jnp.abs(out_big - ref_big)))

    print("KERNEL_OK")
</pallas_src>

<mosaic_0001>
module attributes {stable_mosaic.version = 11 : i64} {
  func.func @_relation_agg_kernel(%arg0: i32, %arg1: i32, %arg2: memref<8x128xf32, #tpu.memory_space<vmem>>, %arg3: memref<128x128xf32, #tpu.memory_space<vmem>>, %arg4: memref<1x128xf32, #tpu.memory_space<vmem>>, %arg5: memref<128x4xf32, #tpu.memory_space<vmem>>, %arg6: memref<4x128xf32, #tpu.memory_space<vmem>>, %arg7: memref<8x32xf32, #tpu.memory_space<vmem>>, %arg8: memref<1x128xf32, #tpu.memory_space<vmem>>, %arg9: memref<1x128xf32, #tpu.memory_space<vmem>>) attributes {dimension_semantics = [#tpu.dimension_semantics<arbitrary>, #tpu.dimension_semantics<arbitrary>], iteration_bounds = array<i64: 2, 1>, scalar_prefetch = 0 : i64, scratch_operands = 2 : i64, tpu.core_type = #tpu.core_type<tc>, window_params = [{transform_indices = @transform_0, window_bounds = array<i64: 8, 128>}, {pipeline_mode = #tpu.pipeline_mode<synchronous>, transform_indices = @transform_1, window_bounds = array<i64: 128, 128>}, {pipeline_mode = #tpu.pipeline_mode<synchronous>, transform_indices = @transform_2, window_bounds = array<i64: 1, 128>}, {pipeline_mode = #tpu.pipeline_mode<synchronous>, transform_indices = @transform_3, window_bounds = array<i64: 128, 4>}, {pipeline_mode = #tpu.pipeline_mode<synchronous>, transform_indices = @transform_4, window_bounds = array<i64: 4, 128>}, {transform_indices = @transform_5, window_bounds = array<i64: 8, 32>}]} {
    %c0_i32 = arith.constant 0 : i32
    %0 = arith.cmpi eq, %arg0, %c0_i32 : i32
    %1 = arith.extui %0 : i1 to i32
    %c0_i32_0 = arith.constant 0 : i32
    %2 = arith.cmpi ne, %1, %c0_i32_0 : i32
    scf.if %2 {
      %c0_i32_2 = arith.constant 0 : i32
      %6 = arith.cmpi eq, %arg1, %c0_i32_2 : i32
      %7 = arith.extui %6 : i1 to i32
      %c0_i32_3 = arith.constant 0 : i32
      %8 = arith.cmpi ne, %7, %c0_i32_3 : i32
      scf.if %8 {
        %cst_16 = arith.constant 0.000000e+00 : f32
        %24 = vector.broadcast %cst_16 : f32 to vector<1x128xf32>
        %c0_17 = arith.constant 0 : index
        %c0_18 = arith.constant 0 : index
        %25 = vector.load %arg8[%c0_17, %c0_18] : memref<1x128xf32, #tpu.memory_space<vmem>>, vector<1x128xf32>
        tpu.vector_store %arg8[%c0_17, %c0_18], %24 {strides = array<i32>} : memref<1x128xf32, #tpu.memory_space<vmem>>, vector<1x128xf32>,
      } else {
      }
      %c0 = arith.constant 0 : index
      %c0_4 = arith.constant 0 : index
      %9 = vector.load %arg2[%c0, %c0_4] : memref<8x128xf32, #tpu.memory_space<vmem>>, vector<8x128xf32>
      %c0_5 = arith.constant 0 : index
      %c0_6 = arith.constant 0 : index
      %10 = vector.load %arg3[%c0_5, %c0_6] : memref<128x128xf32, #tpu.memory_space<vmem>>, vector<128x128xf32>
      %cst = arith.constant dense<0.000000e+00> : vector<8x128xf32>
      %11 = tpu.matmul %9, %10, %cst {dimension_numbers = #tpu.dot_dimension_numbers<[1], [0], [0], [1], [0, 0, 1, 1], [], []>} : vector<8x128xf32>, vector<128x128xf32>, vector<8x128xf32> -> vector<8x128xf32>
      %c0_7 = arith.constant 0 : index
      %c0_8 = arith.constant 0 : index
      %12 = vector.load %arg4[%c0_7, %c0_8] : memref<1x128xf32, #tpu.memory_space<vmem>>, vector<1x128xf32>
      %13 = vector.broadcast %12 : vector<1x128xf32> to vector<8x128xf32>
      %14 = arith.addf %11, %13 : vector<8x128xf32>
      %15 = math.tanh %14 : vector<8x128xf32>
      %c0_9 = arith.constant 0 : index
      %c0_10 = arith.constant 0 : index
      %16 = vector.load %arg8[%c0_9, %c0_10] : memref<1x128xf32, #tpu.memory_space<vmem>>, vector<1x128xf32>
      %cst_11 = arith.constant dense<0.000000e+00> : vector<128xf32>
      %17 = vector.multi_reduction <add>, %15, %cst_11 [0] : vector<8x128xf32> to vector<128xf32>
      %18 = vector.shape_cast %17 : vector<128xf32> to vector<1x128xf32>
      %19 = arith.addf %16, %18 : vector<1x128xf32>
      %c0_12 = arith.constant 0 : index
      %c0_13 = arith.constant 0 : index
      %20 = vector.load %arg8[%c0_12, %c0_13] : memref<1x128xf32, #tpu.memory_space<vmem>>, vector<1x128xf32>
      tpu.vector_store %arg8[%c0_12, %c0_13], %19 {strides = array<i32>} : memref<1x128xf32, #tpu.memory_space<vmem>>, vector<1x128xf32>,
      %c0_i32_14 = arith.constant 0 : i32
      %21 = arith.cmpi eq, %arg1, %c0_i32_14 : i32
      %22 = arith.extui %21 : i1 to i32
      %c0_i32_15 = arith.constant 0 : i32
      %23 = arith.cmpi ne, %22, %c0_i32_15 : i32
      scf.if %23 {
        %c0_16 = arith.constant 0 : index
        %c0_17 = arith.constant 0 : index
        %24 = vector.load %arg8[%c0_16, %c0_17] : memref<1x128xf32, #tpu.memory_space<vmem>>, vector<1x128xf32>
        %c0_18 = arith.constant 0 : index
        %c0_19 = arith.constant 0 : index
        %25 = vector.load %arg5[%c0_18, %c0_19] : memref<128x4xf32, #tpu.memory_space<vmem>>, vector<128x4xf32>
        %cst_20 = arith.constant dense<0.000000e+00> : vector<1x4xf32>
        %26 = tpu.matmul %24, %25, %cst_20 {dimension_numbers = #tpu.dot_dimension_numbers<[1], [0], [0], [1], [0, 0, 1, 1], [], []>} : vector<1x128xf32>, vector<128x4xf32>, vector<1x4xf32> -> vector<1x4xf32>
        %cst_21 = arith.constant 1.250000e-01 : f32
        %27 = vector.broadcast %cst_21 : f32 to vector<1x4xf32>
        %28 = arith.mulf %26, %27 : vector<1x4xf32>
        %cst_22 = arith.constant dense<0xFF800000> : vector<1xf32>
        %29 = vector.multi_reduction <maximumf>, %28, %cst_22 [1] : vector<1x4xf32> to vector<1xf32>
        %30 = vector.shape_cast %29 : vector<1xf32> to vector<1x1xf32>
        %31 = vector.broadcast %30 : vector<1x1xf32> to vector<1x4xf32>
        %32 = arith.subf %28, %31 : vector<1x4xf32>
        %33 = math.exp %32 : vector<1x4xf32>
        %cst_23 = arith.constant dense<0.000000e+00> : vector<1xf32>
        %34 = vector.multi_reduction <add>, %33, %cst_23 [1] : vector<1x4xf32> to vector<1xf32>
        %35 = vector.shape_cast %34 : vector<1xf32> to vector<1x1xf32>
        %36 = vector.broadcast %35 : vector<1x1xf32> to vector<1x4xf32>
        %37 = arith.divf %33, %36 : vector<1x4xf32>
        %c0_24 = arith.constant 0 : index
        %c0_25 = arith.constant 0 : index
        %38 = vector.load %arg6[%c0_24, %c0_25] : memref<4x128xf32, #tpu.memory_space<vmem>>, vector<4x128xf32>
        %cst_26 = arith.constant dense<0.000000e+00> : vector<1x128xf32>
        %39 = tpu.matmul %37, %38, %cst_26 {dimension_numbers = #tpu.dot_dimension_numbers<[1], [0], [0], [1], [0, 0, 1, 1], [], []>} : vector<1x4xf32>, vector<4x128xf32>, vector<1x128xf32> -> vector<1x128xf32>
        %c0_27 = arith.constant 0 : index
        %c0_28 = arith.constant 0 : index
        %40 = vector.load %arg9[%c0_27, %c0_28] : memref<1x128xf32, #tpu.memory_space<vmem>>, vector<1x128xf32>
        tpu.vector_store %arg9[%c0_27, %c0_28], %39 {strides = array<i32>} : memref<1x128xf32, #tpu.memory_space<vmem>>, vector<1x128xf32>,
      } else {
      }
    } else {
    }
    %c1_i32 = arith.constant 1 : i32
    %3 = arith.cmpi eq, %arg0, %c1_i32 : i32
    %4 = arith.extui %3 : i1 to i32
    %c0_i32_1 = arith.constant 0 : i32
    %5 = arith.cmpi ne, %4, %c0_i32_1 : i32
    scf.if %5 {
      %c0 = arith.constant 0 : index
      %c0_2 = arith.constant 0 : index
      %6 = vector.load %arg2[%c0, %c0_2] : memref<8x128xf32, #tpu.memory_space<vmem>>, vector<8x128xf32>
      %c0_3 = arith.constant 0 : index
      %c0_4 = arith.constant 0 : index
      %7 = vector.load %arg9[%c0_3, %c0_4] : memref<1x128xf32, #tpu.memory_space<vmem>>, vector<1x128xf32>
      %8 = vector.broadcast %7 : vector<1x128xf32> to vector<8x128xf32>
      %9 = arith.mulf %6, %8 : vector<8x128xf32>
      %10 = vector.extract_strided_slice %9 {offsets = [0, 0], sizes = [8, 32], strides = [1, 1]} : vector<8x128xf32> to vector<8x32xf32>
      %11 = vector.extract_strided_slice %9 {offsets = [0, 32], sizes = [8, 32], strides = [1, 1]} : vector<8x128xf32> to vector<8x32xf32>
      %12 = arith.addf %10, %11 : vector<8x32xf32>
      %13 = vector.extract_strided_slice %9 {offsets = [0, 64], sizes = [8, 32], strides = [1, 1]} : vector<8x128xf32> to vector<8x32xf32>
      %14 = arith.addf %12, %13 : vector<8x32xf32>
      %15 = vector.extract_strided_slice %9 {offsets = [0, 96], sizes = [8, 32], strides = [1, 1]} : vector<8x128xf32> to vector<8x32xf32>
      %16 = arith.addf %14, %15 : vector<8x32xf32>
      %c0_5 = arith.constant 0 : index
      %c0_6 = arith.constant 0 : index
      %17 = vector.load %arg7[%c0_5, %c0_6] : memref<8x32xf32, #tpu.memory_space<vmem>>, vector<8x32xf32>
      tpu.vector_store %arg7[%c0_5, %c0_6], %16 {strides = array<i32>} : memref<8x32xf32, #tpu.memory_space<vmem>>, vector<8x32xf32>,
    } else {
    }
    return
  }
  func.func @transform_0(%arg0: i32, %arg1: i32) -> (i32, i32) {
    %c0_i32 = arith.constant 0 : i32
    %c0_i32_0 = arith.constant 0 : i32
    return %arg1, %c0_i32 : i32, i32
  }
  func.func @transform_1(%arg0: i32, %arg1: i32) -> (i32, i32) {
    %c0_i32 = arith.constant 0 : i32
    %c0_i32_0 = arith.constant 0 : i32
    %c0_i32_1 = arith.constant 0 : i32
    return %c0_i32, %c0_i32_0 : i32, i32
  }
  func.func @transform_2(%arg0: i32, %arg1: i32) -> (i32, i32) {
    %c0_i32 = arith.constant 0 : i32
    %c0_i32_0 = arith.constant 0 : i32
    %c0_i32_1 = arith.constant 0 : i32
    return %c0_i32, %c0_i32_0 : i32, i32
  }
  func.func @transform_3(%arg0: i32, %arg1: i32) -> (i32, i32) {
    %c0_i32 = arith.constant 0 : i32
    %c0_i32_0 = arith.constant 0 : i32
    %c0_i32_1 = arith.constant 0 : i32
    return %c0_i32, %c0_i32_0 : i32, i32
  }
  func.func @transform_4(%arg0: i32, %arg1: i32) -> (i32, i32) {
    %c0_i32 = arith.constant 0 : i32
    %c0_i32_0 = arith.constant 0 : i32
    %c0_i32_1 = arith.constant 0 : i32
    return %c0_i32, %c0_i32_0 : i32, i32
  }
  func.func @transform_5(%arg0: i32, %arg1: i32) -> (i32, i32) {
    %0 = arith.muli %arg1, %arg0 : i32
    %c0_i32 = arith.constant 0 : i32
    %c0_i32_0 = arith.constant 0 : i32
    return %0, %c0_i32 : i32, i32
  }
}

</mosaic_0001>

<llo_original>
// kernel: tpu_custom_call.1
$region0: #{tpu_custom_call.1}
  #allocation0 [shape = 'u32[]', space=smem, size = 0x4, offset = 0x4, fixed_abs, tag = 'smem constant byte address 0x4 - core index']
  #allocation1 [shape = 'u32[72,128]{1,0:T(1,128)}', space=vmem, size = 0x9000, scoped, tag = 'internal scratch']
  #allocation2 [shape = 'f32[1,128]{1,0:T(1,128)}', space=vmem, size = 0x200, scoped, tag = 'scratch operand']
  #allocation3 [shape = 'f32[1,128]{1,0:T(1,128)}', space=vmem, size = 0x200, scoped, tag = 'scratch operand']
  %s0 = inlined_call_operand.hbm [shape: f32[8,128], index: 0, kind: input, shape index: {}]
  %s1 = inlined_call_operand.vmem [shape: f32[128,128], index: 1, kind: input, shape index: {}]
  %s2 = inlined_call_operand.vmem [shape: f32[1,128], index: 2, kind: input, shape index: {}]
  %s3 = inlined_call_operand.vmem [shape: f32[128,4], index: 3, kind: input, shape index: {}]
  %s4 = inlined_call_operand.vmem [shape: f32[4,128], index: 4, kind: input, shape index: {}]
  %s5 = inlined_call_operand.hbm [shape: f32[8,32], index: 5, kind: output, shape index: {}]
  %s6 = sld [smem:[#allocation0]]
  $region73: #{tpu_custom_call.1} parent=0
    _
  %s8 = ssub.s32 1, %s6
  %s9 = scalar_select 0, %s8, %s6
  $region1: #{tpu_custom_call.1} parent=0
    #allocation4 [shape = 'u8[4096]{0}', space=vmem, size = 0x1000, scoped, tag = 'input window, operand 0, single buffered']
    #allocation5 [shape = 's32[2]{0}', space=sflag, size = 0x8, scoped, tag = 'scoped memory for tpu_custom_call.1']
    #allocation6 [shape = 's32[2]{0}', space=sflag, size = 0x8, scoped, tag = 'scoped memory for tpu_custom_call.1']
    #allocation7 [shape = 'u8[8192]{0}', space=vmem, size = 0x2000, scoped, tag = 'output window, operand 0']
    %10 = vsyncpa [#allocation5], 0
    %11 = vsyncpa [#allocation6], 0
    %s12 = scalar_lea.sflag [#allocation6], 1
    %13 = vsyncpa %s12, 0
    loop: start=0, step=1, limit=4
    $region2: #{tpu_custom_call.1} parent=1 // loop_pre_header
      _
    $region3: #{tpu_custom_call.1} parent=1 // loop_header
      %s15 = sphi 0, %s19
      %p16 = scmp.ge.s32.totalorder %s15, 4
      %s22 = sphi 0, %s34
      %s23 = sphi 0, %s30
      %s24 = sphi 0, %s22
      %s25 = sphi 0, %s23
      %s26 = sphi 0, %s24
      %s27 = sphi 0, %s25
      %s37 = sphi 0, %s39
      %s40 = sphi 0, %s37
      %s41 = sphi 0, %s40
      %s57 = sphi 0, %s41
      %s61 = sphi 0, %s61
      %s63 = sphi 0, %s61
      %s64 = sphi 0, %s63
      %s78 = sphi 0, %s64
      %s82 = sphi 0, %s82
      %s84 = sphi 0, %s82
      %s85 = sphi 0, %s84
      %s99 = sphi 0, %s85
      %s103 = sphi 0, %s103
      %s105 = sphi 0, %s103
      %s106 = sphi 0, %s105
      %s120 = sphi 0, %s106
      %s124 = sphi 0, %s124
      %s126 = sphi 0, %s124
      %s127 = sphi 0, %s126
      %s141 = sphi 0, %s127
      %s149 = sphi 0, %s151
      %s152 = sphi 0, %s149
      %s153 = sphi 0, %s152
      %s169 = sphi 0, %s153
    $region4: #{tpu_custom_call.1} parent=1 // loop_header_branch
      %18 = sbr.rel (%p16) target = $region8
    $region5: #{tpu_custom_call.1} parent=1 // loop_body
      %s20 = ssub.s32 %s15, 1
      %s21 = ssub.s32 %s15, 2
      %s28 = sadd.s32 1, %s23
      %p29 = scmp.ge.s32.totalorder %s28, 1
      %s30 = scalar_select %p29, 0, %s28
      %s31 = sadd.s32 1, %s22
      %s32 = scalar_select %p29, %s31, %s22
      %p33 = scmp.ge.s32.totalorder %s32, 2
      %s34 = scalar_select %p33, 0, %s32
      %s35 = ssub.s32 %s23, %s30
      %p36 = scmp.eq.s32.totalorder %s35, 0
      %s38 = sadd.s32 %s37, 1
      %s39 = scalar_select %p36, %s37, %s38
      %p42 = pneg %p36
      %p43 = scmp.eq.s32.totalorder %s15, 1
      %p44 = por %p42, %p43
      %p45 = scmp.ne.s32.totalorder %s37, %s40
      %p46 = scmp.eq.s32.totalorder %s15, 0
      %p47 = por %p45, %p46
      %p48 = scmp.ne.s32.totalorder %s37, %s40
      %p49 = scmp.eq.s32.totalorder %s20, 1
      %p50 = por %p48, %p49
      %p51 = scmp.ne.s32.totalorder %s40, %s41
      %p52 = scmp.eq.s32.totalorder %s20, 0
      %p53 = por %p51, %p52
      %p54 = scmp.ne.s32.totalorder %s40, %s41
      %p55 = scmp.eq.s32.totalorder %s21, 1
      %p56 = por %p54, %p55
      %p58 = scmp.ne.s32.totalorder %s41, %s57
      %p59 = scmp.eq.s32.totalorder %s21, 0
      %p60 = por %p58, %p59
      %s62 = sadd.s32 %s61, 1
      %p65 = scmp.eq.s32.totalorder %s15, 1
      %p66 = scmp.ne.s32.totalorder %s61, %s63
      %p67 = scmp.eq.s32.totalorder %s15, 0
      %p68 = por %p66, %p67
      %p69 = scmp.ne.s32.totalorder %s61, %s63
      %p70 = scmp.eq.s32.totalorder %s20, 1
      %p71 = por %p69, %p70
      %p72 = scmp.ne.s32.totalorder %s63, %s64
      %p73 = scmp.eq.s32.totalorder %s20, 0
      %p74 = por %p72, %p73
      %p75 = scmp.ne.s32.totalorder %s63, %s64
      %p76 = scmp.eq.s32.totalorder %s21, 1
      %p77 = por %p75, %p76
      %p79 = scmp.ne.s32.totalorder %s64, %s78
      %p80 = scmp.eq.s32.totalorder %s21, 0
      %p81 = por %p79, %p80
      %s83 = sadd.s32 %s82, 1
      %p86 = scmp.eq.s32.totalorder %s15, 1
      %p87 = scmp.ne.s32.totalorder %s82, %s84
      %p88 = scmp.eq.s32.totalorder %s15, 0
      %p89 = por %p87, %p88
      %p90 = scmp.ne.s32.totalorder %s82, %s84
      %p91 = scmp.eq.s32.totalorder %s20, 1
      %p92 = por %p90, %p91
      %p93 = scmp.ne.s32.totalorder %s84, %s85
      %p94 = scmp.eq.s32.totalorder %s20, 0
      %p95 = por %p93, %p94
      %p96 = scmp.ne.s32.totalorder %s84, %s85
      %p97 = scmp.eq.s32.totalorder %s21, 1
      %p98 = por %p96, %p97
      %p100 = scmp.ne.s32.totalorder %s85, %s99
      %p101 = scmp.eq.s32.totalorder %s21, 0
      %p102 = por %p100, %p101
      %s104 = sadd.s32 %s103, 1
      %p107 = scmp.eq.s32.totalorder %s15, 1
      %p108 = scmp.ne.s32.totalorder %s103, %s105
      %p109 = scmp.eq.s32.totalorder %s15, 0
      %p110 = por %p108, %p109
      %p111 = scmp.ne.s32.totalorder %s103, %s105
      %p112 = scmp.eq.s32.totalorder %s20, 1
      %p113 = por %p111, %p112
      %p114 = scmp.ne.s32.totalorder %s105, %s106
      %p115 = scmp.eq.s32.totalorder %s20, 0
      %p116 = por %p114, %p115
      %p117 = scmp.ne.s32.totalorder %s105, %s106
      %p118 = scmp.eq.s32.totalorder %s21, 1
      %p119 = por %p117, %p118
      %p121 = scmp.ne.s32.totalorder %s106, %s120
      %p122 = scmp.eq.s32.totalorder %s21, 0
      %p123 = por %p121, %p122
      %s125 = sadd.s32 %s124, 1
      %p128 = scmp.eq.s32.totalorder %s15, 1
      %p129 = scmp.ne.s32.totalorder %s124, %s126
      %p130 = scmp.eq.s32.totalorder %s15, 0
      %p131 = por %p129, %p130
      %p132 = scmp.ne.s32.totalorder %s124, %s126
      %p133 = scmp.eq.s32.totalorder %s20, 1
      %p134 = por %p132, %p133
      %p135 = scmp.ne.s32.totalorder %s126, %s127
      %p136 = scmp.eq.s32.totalorder %s20, 0
      %p137 = por %p135, %p136
      %p138 = scmp.ne.s32.totalorder %s126, %s127
      %p139 = scmp.eq.s32.totalorder %s21, 1
      %p140 = por %p138, %p139
      %p142 = scmp.ne.s32.totalorder %s127, %s141
      %p143 = scmp.eq.s32.totalorder %s21, 0
      %p144 = por %p142, %p143
      %s145 = smul.u32 %s23, %s22
      %s146 = smul.u32 %s30, %s34
      %s147 = ssub.s32 %s145, %s146
      %p148 = scmp.eq.s32.totalorder %s147, 0
      %s150 = sadd.s32 %s149, 1
      %s151 = scalar_select %p148, %s149, %s150
      %p154 = pneg %p148
      %p155 = scmp.eq.s32.totalorder %s15, 1
      %p156 = por %p154, %p155
      %p157 = scmp.ne.s32.totalorder %s149, %s152
      %p158 = scmp.eq.s32.totalorder %s15, 0
      %p159 = por %p157, %p158
      %p160 = scmp.ne.s32.totalorder %s149, %s152
      %p161 = scmp.eq.s32.totalorder %s20, 1
      %p162 = por %p160, %p161
      %p163 = scmp.ne.s32.totalorder %s152, %s153
      %p164 = scmp.eq.s32.totalorder %s20, 0
      %p165 = por %p163, %p164
      %p166 = scmp.ne.s32.totalorder %s152, %s153
      %p167 = scmp.eq.s32.totalorder %s21, 1
      %p168 = por %p166, %p167
      %p170 = scmp.ne.s32.totalorder %s153, %s169
      %p171 = scmp.eq.s32.totalorder %s21, 0
      %p172 = por %p170, %p171
      %p173 = scmp.le.s32.totalorder 1, %s15
      %p174 = scmp.lt.s32.totalorder %s15, 3
      %p175 = pnand %p173, %p174
      %p176 = pneg %p175
      // Predicated region
      $region9: #{tpu_custom_call.1} parent=5 // pred_check
        _
      $region10: #{tpu_custom_call.1} parent=5 // pred_check_branch
        %178 = sbr.rel (%p175) target = $region12
      $region11: #{tpu_custom_call.1} parent=5 // pred_region
        %s179 = ssub.s32 %s15, 1
        // Predicated region
        $region13: #{tpu_custom_call.1} parent=11 // pred_check
          %p180 = pneg %p53
        $region14: #{tpu_custom_call.1} parent=11 // pred_check_branch
          %182 = sbr.rel (%p180) target = $region16
        $region15: #{tpu_custom_call.1} parent=11 // pred_region
          %184 = vsyncadd [#allocation5], 0
          %s185 = smul.addr %s25, 8
          %s186 = scalar_lea.hbm %s0, %s185
          %s188 = sshll.u32 %s186, 4
          %s189 = int_to_ptr.hbm [resolvable:$true] %s188
          %s190 = sshll.u32 [#allocation4], 4
          %s191 = int_to_ptr.vmem [resolvable:$true] %s190
          %193 = dma.hbm_to_vmem [thread:$0]  %s189, 128, %s191, [#allocation5]
        $region16: #{tpu_custom_call.1} parent=11 // pred_fallthru
          _
        // Predicated region
        $region17: #{tpu_custom_call.1} parent=11 // pred_check
          %p194 = pneg %p74
        $region18: #{tpu_custom_call.1} parent=11 // pred_check_branch
          %196 = sbr.rel (%p194) target = $region20
        $region19: #{tpu_custom_call.1} parent=11 // pred_region
          _
        $region20: #{tpu_custom_call.1} parent=11 // pred_fallthru
          _
        // Predicated region
        $region21: #{tpu_custom_call.1} parent=11 // pred_check
          %p197 = pneg %p95
        $region22: #{tpu_custom_call.1} parent=11 // pred_check_branch
          %199 = sbr.rel (%p197) target = $region24
        $region23: #{tpu_custom_call.1} parent=11 // pred_region
          _
        $region24: #{tpu_custom_call.1} parent=11 // pred_fallthru
          _
        // Predicated region
        $region25: #{tpu_custom_call.1} parent=11 // pred_check
          %p200 = pneg %p116
        $region26: #{tpu_custom_call.1} parent=11 // pred_check_branch
          %202 = sbr.rel (%p200) target = $region28
        $region27: #{tpu_custom_call.1} parent=11 // pred_region
          _
        $region28: #{tpu_custom_call.1} parent=11 // pred_fallthru
          _
        // Predicated region
        $region29: #{tpu_custom_call.1} parent=11 // pred_check
          %p203 = pneg %p137
        $region30: #{tpu_custom_call.1} parent=11 // pred_check_branch
          %205 = sbr.rel (%p203) target = $region32
        $region31: #{tpu_custom_call.1} parent=11 // pred_region
          _
        $region32: #{tpu_custom_call.1} parent=11 // pred_fallthru
          _
      $region12: #{tpu_custom_call.1} parent=5 // pred_fallthru
        _
      %p206 = scmp.lt.s32.totalorder %s15, 2
      // Predicated region
      $region33: #{tpu_custom_call.1} parent=5 // pred_check
        %p207 = pneg %p206
      $region34: #{tpu_custom_call.1} parent=5 // pred_check_branch
        %209 = sbr.rel (%p207) target = $region36
      $region35: #{tpu_custom_call.1} parent=5 // pred_region
        _
      $region36: #{tpu_custom_call.1} parent=5 // pred_fallthru
        _
      %p210 = scmp.le.s32.totalorder 1, %s15
      %p211 = scmp.lt.s32.totalorder %s15, 3
      %p212 = pnand %p210, %p211
      %p213 = pneg %p212
      // Predicated region
      $region37: #{tpu_custom_call.1} parent=5 // pred_check
        _
      $region38: #{tpu_custom_call.1} parent=5 // pred_check_branch
        %215 = sbr.rel (%p212) target = $region40
      $region39: #{tpu_custom_call.1} parent=5 // pred_region
        %s216 = ssub.s32 %s15, 1
        // Predicated region
        $region41: #{tpu_custom_call.1} parent=39 // pred_check
          %p217 = pneg %p53
        $region42: #{tpu_custom_call.1} parent=39 // pred_check_branch
          %219 = sbr.rel (%p217) target = $region44
        $region43: #{tpu_custom_call.1} parent=39 // pred_region
          %221 = dma.done [#allocation5], 128
        $region44: #{tpu_custom_call.1} parent=39 // pred_fallthru
          _
        %p222 = pneg %p53
        %p223 = pneg %p50
        %p224 = pneg %p74
        %p225 = pneg %p71
        %p226 = pneg %p95
        %p227 = pneg %p92
        %p228 = pneg %p116
        %p229 = pneg %p113
        %p230 = pneg %p137
        %p231 = pneg %p134
        %p232 = pneg %p165
        %p233 = pneg %p162
        %s234 = sand.u32 %s152, 1
        %s235 = scalar_lea.sflag [#allocation6], %s234
        %s236 = sand.u32 %s152, 1
        %s237 = smul.addr %s236, 8
        %s238 = scalar_lea.vmem [#allocation7], %s237
        %s239 = smul.u32 %s25, %s24
        %p240 = scmp.eq.s32.totalorder %s24, 0
        // Predicated region
        $region45: #{tpu_custom_call.1} parent=39 // pred_check
          %p241 = pneg %p240
        $region46: #{tpu_custom_call.1} parent=39 // pred_check_branch
          %243 = sbr.rel (%p241) target = $region48
        $region47: #{tpu_custom_call.1} parent=39 // pred_region
          %p244 = scmp.eq.s32.totalorder %s25, 0
          // Predicated region
          $region49: #{tpu_custom_call.1} parent=47 // pred_check
            %p245 = pneg %p244
          $region50: #{tpu_custom_call.1} parent=47 // pred_check_branch
            %247 = sbr.rel (%p245) target = $region52
          $region51: #{tpu_custom_call.1} parent=47 // pred_region
            %248 = vst [vmem:[#allocation2] sm:$0x1] 0.0
          $region52: #{tpu_custom_call.1} parent=47 // pred_fallthru
            _
          %v249 = vld [vmem:[#allocation4] sm:$0xff]
          %v250 = vld [vmem:[%s1] sm:$0xff]
          %v251 = vld [vmem:[%s1 + $0x8] sm:$0xff]
          %v252 = vld [vmem:[%s1 + $0x10] sm:$0xff]
          %v253 = vld [vmem:[%s1 + $0x18] sm:$0xff]
          %v254 = vld [vmem:[%s1 + $0x20] sm:$0xff]
          %v255 = vld [vmem:[%s1 + $0x28] sm:$0xff]
          %v256 = vld [vmem:[%s1 + $0x30] sm:$0xff]
          %v257 = vld [vmem:[%s1 + $0x38] sm:$0xff]
          %v258 = vld [vmem:[%s1 + $0x40] sm:$0xff]
          %v259 = vld [vmem:[%s1 + $0x48] sm:$0xff]
          %v260 = vld [vmem:[%s1 + $0x50] sm:$0xff]
          %v261 = vld [vmem:[%s1 + $0x58] sm:$0xff]
          %v262 = vld [vmem:[%s1 + $0x60] sm:$0xff]
          %v263 = vld [vmem:[%s1 + $0x68] sm:$0xff]
          %v264 = vld [vmem:[%s1 + $0x70] sm:$0xff]
          %v265 = vld [vmem:[%s1 + $0x78] sm:$0xff]
          %v266 = vld [vmem:[%s2] sm:$0x1]
          %v268 = vperm.slane %v266, 0
          %270 = vmatpush.msra.mxu0 %v265
          %271 = vmatpush.msra.mxu0 %v264
          %272 = vmatpush.msra.mxu0 %v263
          %273 = vmatpush.msra.mxu0 %v262
          %274 = vmatpush.msra.mxu0 %v261
          %275 = vmatpush.msra.mxu0 %v260
          %276 = vmatpush.msra.mxu0 %v259
          %277 = vmatpush.msra.mxu0 %v258
          %278 = vmatpush.msra.mxu0 %v257
          %279 = vmatpush.msra.mxu0 %v256
          %280 = vmatpush.msra.mxu0 %v255
          %281 = vmatpush.msra.mxu0 %v254
          %282 = vmatpush.msra.mxu0 %v253
          %283 = vmatpush.msra.mxu0 %v252
          %284 = vmatpush.msra.mxu0 %v251
          %285 = vmatpush.msra.mxu0 %v250
          %286 = vmatmul.f32.gmra.mxu0 %v249
          %v287 = vpop.f32.mrf.mxu0
          %v288 = vadd.f32 %v268, %v287
          %289 = vdwg.mxu0
          %v290 = vtanh.pop %v288
          %v291 = vld [vmem:[#allocation2] sm:$0x1]
          %v292 = vrot.slane %v290, 4
          %v293 = vadd.f32 %v290, %v292
          %v294 = vrot.slane %v293, 2
          %v295 = vadd.f32 %v293, %v294
          %v296 = vrot.slane %v295, 1
          %v297 = vadd.f32 %v295, %v296
          %v298 = vadd.f32 %v291, %v297
          %299 = vst [vmem:[#allocation2] sm:$0x1] %v298
          // Predicated region
          $region53: #{tpu_custom_call.1} parent=47 // pred_check
            %p300 = pneg %p244
          $region54: #{tpu_custom_call.1} parent=47 // pred_check_branch
            %302 = sbr.rel (%p300) target = $region56
          $region55: #{tpu_custom_call.1} parent=47 // pred_region
            %v303 = vld [vmem:[#allocation2] sm:$0x1]
            %v304 = vld [vmem:[%s3] sm:$0xff]
            %v305 = vld [vmem:[%s3 + $0x8] sm:$0xff]
            %v306 = vld [vmem:[%s3 + $0x10] sm:$0xff]
            %v307 = vld [vmem:[%s3 + $0x18] sm:$0xff]
            %v308 = vld [vmem:[%s3 + $0x20] sm:$0xff]
            %v309 = vld [vmem:[%s3 + $0x28] sm:$0xff]
            %v310 = vld [vmem:[%s3 + $0x30] sm:$0xff]
            %v311 = vld [vmem:[%s3 + $0x38] sm:$0xff]
            %v312 = vld [vmem:[%s3 + $0x40] sm:$0xff]
            %v313 = vld [vmem:[%s3 + $0x48] sm:$0xff]
            %v314 = vld [vmem:[%s3 + $0x50] sm:$0xff]
            %v315 = vld [vmem:[%s3 + $0x58] sm:$0xff]
            %v316 = vld [vmem:[%s3 + $0x60] sm:$0xff]
            %v317 = vld [vmem:[%s3 + $0x68] sm:$0xff]
            %v318 = vld [vmem:[%s3 + $0x70] sm:$0xff]
            %v319 = vld [vmem:[%s3 + $0x78] sm:$0xff]
            %320 = vmatpush.msra.mxu0 %v319
            %321 = vmatpush.msra.mxu0 %v318
            %322 = vmatpush.msra.mxu0 %v317
            %323 = vmatpush.msra.mxu0 %v316
            %324 = vmatpush.msra.mxu0 %v315
            %325 = vmatpush.msra.mxu0 %v314
            %326 = vmatpush.msra.mxu0 %v313
            %327 = vmatpush.msra.mxu0 %v312
            %328 = vmatpush.msra.mxu0 %v311
            %329 = vmatpush.msra.mxu0 %v310
            %330 = vmatpush.msra.mxu0 %v309
            %331 = vmatpush.msra.mxu0 %v308
            %332 = vmatpush.msra.mxu0 %v307
            %333 = vmatpush.msra.mxu0 %v306
            %334 = vmatpush.msra.mxu0 %v305
            %335 = vmatpush.msra.mxu0 %v304
            %336 = vmatmul.f32.gmra.mxu0 %v303
            %v337 = vpop.f32.mrf.mxu0
            %v338 = vadd.f32 0.0, %v337
            %339 = vdwg.mxu0
            %v340 = vmul.f32 %v338, 0.125
            %vm341 = vcmask 24576
            %v342 = vsel %vm341, %v340, -inf
            %343 = vmax.xlane.f32.xlu0 %v342
            %v344 = vpop.xlane.xlu0 %343
            %v345 = vsub.f32 %v340, %v344
            %v346 = vmul.f32 %v345, 1.442695
            %v347 = vpow.pop %v346
            %v348 = vsel %vm341, %v347, 0.0
            %349 = vadd.xlane.f32.xlu0 %v348
            %v350 = vpop.xlane.xlu0 %349
            %v351 = vrcp.pop %v350
            %v352 = vmul.f32 %v350, %v351
            %v353 = vsub.f32 1.0, %v352
            %v354 = vmul.f32 %v351, %v353
            %v355 = vadd.f32 %v351, %v354
            %vm356 = vweird.f32 %v350
            %vm357 = vweird.f32 %v351
            %vm358 = vmor %vm356, %vm357
            %v359 = vsel %vm358, %v351, %v355
            %v360 = vand.u32 2147483647, %v350
            %vm361 = vcmp.eq.f32.partialorder %v360, 8.507059e+37
            %v362 = vand.u32 %v350, 2147483648
            %v363 = vor.u32 1.1754944e-38, %v362
            %v364 = vsel %vm361, %v363, %v359
            %v365 = vmul.f32 %v347, %v364
            %v366 = vld [vmem:[%s4] sm:$0xf]
            %vm367 = vcmask 31744
            %v369 = vsel %vm367, %v365, 0
            %vm371 = vcmask 1043456
            %v373 = vsel %vm371, %v366, 0
            %375 = vmatpush.msra.mxu0 0.0
            %376 = vmatpush.msra.mxu0 0.0
            %377 = vmatpush.msra.mxu0 0.0
            %378 = vmatpush.msra.mxu0 0.0
            %379 = vmatpush.msra.mxu0 0.0
            %380 = vmatpush.msra.mxu0 0.0
            %381 = vmatpush.msra.mxu0 0.0
            %382 = vmatpush.msra.mxu0 0.0
            %383 = vmatpush.msra.mxu0 0.0
            %384 = vmatpush.msra.mxu0 0.0
            %385 = vmatpush.msra.mxu0 0.0
            %386 = vmatpush.msra.mxu0 0.0
            %387 = vmatpush.msra.mxu0 0.0
            %388 = vmatpush.msra.mxu0 0.0
            %389 = vmatpush.msra.mxu0 0.0
            %390 = vmatpush.msra.mxu0 %v373
            %391 = vmatmul.f32.gmra.mxu0 %v369
            %v392 = vpop.f32.mrf.mxu0
            %v393 = vadd.f32 0.0, %v392
            %394 = vdwg.mxu0
            %395 = vst [vmem:[#allocation3] sm:$0x1] %v393
          $region56: #{tpu_custom_call.1} parent=47 // pred_fallthru
            _
        $region48: #{tpu_custom_call.1} parent=39 // pred_fallthru
          _
        %p396 = scmp.eq.s32.totalorder %s24, 1
        // Predicated region
        $region57: #{tpu_custom_call.1} parent=39 // pred_check
          %p397 = pneg %p396
        $region58: #{tpu_custom_call.1} parent=39 // pred_check_branch
          %399 = sbr.rel (%p397) target = $region60
        $region59: #{tpu_custom_call.1} parent=39 // pred_region
          %v400 = vld [vmem:[#allocation4] sm:$0xff]
          %v401 = vld [vmem:[#allocation3] sm:$0x1]
          %v403 = vperm.slane %v401, 0
          %v405 = vmul.f32 %v400, %v403
          %407 = vrot.lane.b32.xlu0 %v405, 96
          %v408 = vpop.permute.xlu0 %407
          %v410 = vadd.f32 %v405, %v408
          %411 = vrot.lane.b32.xlu0 %v405, 64
          %v412 = vpop.permute.xlu0 %411
          %v414 = vadd.f32 %v410, %v412
          %415 = vrot.lane.b32.xlu0 %v405, 32
          %v416 = vpop.permute.xlu0 %415
          %v418 = vadd.f32 %v414, %v416
          %vm419 = vcmask 261120
          %420 = vst.msk [vmem:[%s238] sm:$0xff] %vm419, %v418
        $region60: #{tpu_custom_call.1} parent=39 // pred_fallthru
          _
        %s421 = sand.u32 %s152, 1
        %s422 = scalar_lea.sflag [#allocation6], %s421
        %s423 = sand.u32 %s152, 1
        %s424 = smul.addr %s423, 8
        %s425 = scalar_lea.vmem [#allocation7], %s424
        // Predicated region
        $region61: #{tpu_custom_call.1} parent=39 // pred_check
          %p426 = pneg %p162
        $region62: #{tpu_custom_call.1} parent=39 // pred_check_branch
          %428 = sbr.rel (%p426) target = $region64
        $region63: #{tpu_custom_call.1} parent=39 // pred_region
          %s429 = smul.u32 %s25, %s24
          %431 = vsyncadd %s422, 0
          %s432 = smul.addr %s429, 8
          %s433 = scalar_lea.hbm %s5, %s432
          %s435 = sshll.u32 %s425, 4
          %s436 = int_to_ptr.vmem [resolvable:$true] %s435
          %s437 = sshll.u32 %s433, 4
          %s438 = int_to_ptr.hbm [resolvable:$true] %s437
          %440 = dma.vmem_to_hbm [thread:$0]  %s436, 128, %s438, %s422
        $region64: #{tpu_custom_call.1} parent=39 // pred_fallthru
          _
      $region40: #{tpu_custom_call.1} parent=5 // pred_fallthru
        _
      %p441 = scmp.le.s32.totalorder 2, %s15
      // Predicated region
      $region65: #{tpu_custom_call.1} parent=5 // pred_check
        %p442 = pneg %p441
      $region66: #{tpu_custom_call.1} parent=5 // pred_check_branch
        %444 = sbr.rel (%p442) target = $region68
      $region67: #{tpu_custom_call.1} parent=5 // pred_region
        %s445 = ssub.s32 %s15, 2
        // Predicated region
        $region69: #{tpu_custom_call.1} parent=67 // pred_check
          %p446 = pneg %p168
        $region70: #{tpu_custom_call.1} parent=67 // pred_check_branch
          %448 = sbr.rel (%p446) target = $region72
        $region71: #{tpu_custom_call.1} parent=67 // pred_region
          %s449 = sand.u32 %s153, 1
          %s450 = scalar_lea.sflag [#allocation6], %s449
          %s451 = sand.u32 %s153, 1
          %s452 = smul.addr %s451, 8
          %s453 = scalar_lea.vmem [#allocation7], %s452
          %455 = dma.done %s450, 128
        $region72: #{tpu_custom_call.1} parent=67 // pred_fallthru
          _
      $region68: #{tpu_custom_call.1} parent=5 // pred_fallthru
        _
    $region6: #{tpu_custom_call.1} parent=1 // loop_footer
      %s19 = sadd.s32 1, %s15
    $region7: #{tpu_custom_call.1} parent=1 // loop_footer_branch
      %14 = sbr.rel target = $region3
    $region8: #{tpu_custom_call.1} parent=1 // loop_exit
      _
    %456 = vsyncpa [#allocation5], 1
    %s457 = scalar_lea.sflag [#allocation5], 1
    %458 = vsyncpa %s457, 1
    %459 = vsyncpa [#allocation6], 1
    %s460 = scalar_lea.sflag [#allocation6], 1
    %461 = vsyncpa %s460, 1

</llo_original>
